<compile_context>
chip_gen: v7x
topology: tpu7x:2x2x1
jax: 0.10.0
libtpu: 0.0.40
codegen_flags: <defaults>
</compile_context>

<pallas_src>
import numpy as np
import jax
import jax.numpy as jnp
from jax import lax
from jax.experimental import pallas as pl
from jax.experimental.pallas import tpu as pltpu

K = 3          # conv kernel size
BN_EPS = 1e-5
LANE = 128


# ------------------------------ weight prep --------------------------------- #

def _fold_bn(gamma, beta, mean, var):
    scale = gamma / jnp.sqrt(var + BN_EPS)
    shift = beta - mean * scale
    return scale, shift


def _tap_weights(w, scale):
    """(C_out, C_in, K) -> (K, C_out, C_in) bf16 with the BN scale folded per out-channel."""
    w = w * scale[:, None, None]
    return jnp.transpose(w, (2, 0, 1)).astype(jnp.bfloat16)


# --------------------------- fused block kernel ------------------------------ #

def _make_kernel(L, LPAD):
    def kernel(x_ref, w1_ref, t1_ref, w2_ref, t2_ref, o_ref, scr):
        # Zero-padded activation lives in a VMEM scratch: columns [L, LPAD) stay 0, so
        # conv "same" padding and the lane-roll wrap-around need no masks/selects.
        scr[...] = jnp.zeros_like(scr)
        scr[:, :L] = x_ref[0]
        xp = scr[...]                                     # (C, LPAD) f32, zeros beyond L

        def conv_bn(ap, w_ref, t_ref):
            # 3 accumulating per-tap dots instead of a (3C, W) im2col slab (1/3 the VMEM,
            # identical MXU flops).  bf16 operands, f32 accumulation.
            a_m1 = pltpu.roll(ap, 1, axis=1)              # col j <- ap[:, j-1]
            a_p1 = pltpu.roll(ap, LPAD - 1, axis=1)       # col j <- ap[:, j+1]
            acc = jnp.dot(w_ref[0], a_m1.astype(jnp.bfloat16),
                          preferred_element_type=jnp.float32)
            acc += jnp.dot(w_ref[1], ap.astype(jnp.bfloat16),
                           preferred_element_type=jnp.float32)
            acc += jnp.dot(w_ref[2], a_p1.astype(jnp.bfloat16),
                           preferred_element_type=jnp.float32)
            return acc + t_ref[...]                       # BN shift (scale folded into w)

        # stage 1: relu(bn1(conv1(x)))
        y = jnp.maximum(conv_bn(xp, w1_ref, t1_ref), 0.0)
        # re-pad the intermediate (pad columns of scr are still 0 -> conv2 zero padding)
        scr[:, :L] = y[:, :L]
        yp = scr[...]
        # stage 2: relu(bn2(conv2_adapted(y)) + identity)
        out = jnp.maximum(conv_bn(yp, w2_ref, t2_ref) + xp, 0.0)
        o_ref[0] = out[:, :L].astype(o_ref.dtype)

    return kernel


def basic_block_lora_forward(x, p):
    """Forward of BasicBlock1d_LoRA (stride=1, downsample=None, inference-mode BN)."""
    B, C, L = x.shape
    assert p["conv1_w"].shape[0] == C          # inplanes == planes in this instantiation
    # LPAD >= L+1 so that roll wrap-around always lands in a zero pad column.
    LPAD = max(LANE, ((L + 1 + LANE - 1) // LANE) * LANE)

    # ---- tiny one-time weight / BN prep (plain XLA) ----
    s1, t1 = _fold_bn(p["bn1_gamma"], p["bn1_beta"], p["bn1_mean"], p["bn1_var"])
    s2, t2 = _fold_bn(p["bn2_gamma"], p["bn2_beta"], p["bn2_mean"], p["bn2_var"])
    # adapted_weight = conv2.weight + sum_i (A_i @ B_i).reshape(C, C, K)
    delta = sum(jnp.matmul(A, Bm) for A, Bm in zip(p["lora_A"], p["lora_B"]))
    w2 = p["conv2_w"] + delta.reshape(C, C, K)
    w1t = _tap_weights(p["conv1_w"], s1)       # (K, C, C) bf16, BN scale folded
    w2t = _tap_weights(w2, s2)
    t1c = t1.reshape(C, 1).astype(jnp.float32)
    t2c = t2.reshape(C, 1).astype(jnp.float32)

    cost = pl.CostEstimate(
        flops=int(4 * B * C * (K * C) * LPAD),                       # 2 convs, 2 flops/MAC
        transcendentals=0,
        bytes_accessed=int(2 * B * C * L * 4 + 2 * K * C * C * 2 + 2 * C * 4),
    )

    return pl.pallas_call(
        _make_kernel(L, LPAD),
        out_shape=jax.ShapeDtypeStruct((B, C, L), x.dtype),
        grid_spec=pltpu.PrefetchScalarGridSpec(
            num_scalar_prefetch=0,
            grid=(B,),
            in_specs=[
                pl.BlockSpec((1, C, L), lambda b: (b, 0, 0)),   # x, per-batch block
                pl.BlockSpec((K, C, C), lambda b: (0, 0, 0)),   # conv1+bn1 tap weights
                pl.BlockSpec((C, 1), lambda b: (0, 0)),         # bn1 shift
                pl.BlockSpec((K, C, C), lambda b: (0, 0, 0)),   # adapted conv2+bn2 taps
                pl.BlockSpec((C, 1), lambda b: (0, 0)),         # bn2 shift
            ],
            out_specs=pl.BlockSpec((1, C, L), lambda b: (b, 0, 0)),
            scratch_shapes=[pltpu.VMEM((C, LPAD), jnp.float32)],
        ),
        compiler_params=pltpu.CompilerParams(
            dimension_semantics=("parallel",)),
        cost_estimate=cost,
    )(x, w1t, t1c, w2t, t2c)


# --------------------------- pure-JAX reference ----------------------------- #

def _ref_conv1d(x, w):
    return lax.conv_general_dilated(
        x, w, window_strides=(1,), padding=((1, 1),),
        dimension_numbers=("NCH", "OIH", "NCH"),
        precision=lax.Precision.HIGHEST)


def _ref_bn(x, gamma, beta, mean, var):
    return ((x - mean[None, :, None]) / jnp.sqrt(var[None, :, None] + BN_EPS)
            * gamma[None, :, None] + beta[None, :, None])


def basic_block_lora_reference(x, p):
    out = jax.nn.relu(_ref_bn(_ref_conv1d(x, p["conv1_w"]),
                              p["bn1_gamma"], p["bn1_beta"],
                              p["bn1_mean"], p["bn1_var"]))
    C_out, C_in, _ = p["conv2_w"].shape
    delta = sum(jnp.matmul(A, Bm) for A, Bm in zip(p["lora_A"], p["lora_B"]))
    adapted_w = p["conv2_w"] + delta.reshape(C_out, C_in, K)
    out = _ref_bn(_ref_conv1d(out, adapted_w),
                  p["bn2_gamma"], p["bn2_beta"], p["bn2_mean"], p["bn2_var"])
    return jax.nn.relu(out + x)


# ----------------------------------- main ------------------------------------ #

if __name__ == "__main__":
    B, C, L = 2, 8, 16          # batch, channels (inplanes == planes), seq length
    planes = C
    rank = 4

    key = jax.random.PRNGKey(0)
    ks = jax.random.split(key, 16)

    x = jax.random.normal(ks[0], (B, C, L), jnp.float32)

    params = {
        "conv1_w": 0.1 * jax.random.normal(ks[1], (planes, C, K), jnp.float32),
        "conv2_w": 0.1 * jax.random.normal(ks[2], (planes, planes, K), jnp.float32),
        "bn1_gamma": 1.0 + 0.1 * jax.random.normal(ks[3], (planes,), jnp.float32),
        "bn1_beta": 0.1 * jax.random.normal(ks[4], (planes,), jnp.float32),
        "bn1_mean": 0.1 * jax.random.normal(ks[5], (planes,), jnp.float32),
        "bn1_var": 0.5 + jax.random.uniform(ks[6], (planes,), jnp.float32),
        "bn2_gamma": 1.0 + 0.1 * jax.random.normal(ks[7], (planes,), jnp.float32),
        "bn2_beta": 0.1 * jax.random.normal(ks[8], (planes,), jnp.float32),
        "bn2_mean": 0.1 * jax.random.normal(ks[9], (planes,), jnp.float32),
        "bn2_var": 0.5 + jax.random.uniform(ks[10], (planes,), jnp.float32),
        # synthetic LoRA adapters (nonzero B so the adapted-weight path is exercised)
        "lora_A": [0.01 * jax.random.normal(ks[11], (planes, rank), jnp.float32),
                   0.01 * jax.random.normal(ks[12], (planes, rank), jnp.float32)],
        "lora_B": [0.5 * jax.random.normal(ks[13], (rank, planes * K), jnp.float32),
                   0.5 * jax.random.normal(ks[14], (rank, planes * K), jnp.float32)],
    }

    out = basic_block_lora_forward(x, params)
    out = jax.block_until_ready(out)

    ref = basic_block_lora_reference(x, params)
    ref = jax.block_until_ready(ref)

    assert out.shape == (B, planes, L)
    # bf16 MXU operands with f32 accumulation -> bf16-level tolerance vs f32 reference.
    if not np.allclose(np.asarray(out), np.asarray(ref), atol=1e-2, rtol=1e-2):
        raise AssertionError("Pallas kernel output does not match JAX reference")

    print("KERNEL_OK")
</pallas_src>

<mosaic_0001>
module attributes {stable_mosaic.version = 11 : i64} {
  func.func @kernel(%arg0: i32, %arg1: memref<1x8x16xf32, #tpu.memory_space<vmem>>, %arg2: memref<3x8x8xbf16, #tpu.memory_space<vmem>>, %arg3: memref<8x1xf32, #tpu.memory_space<vmem>>, %arg4: memref<3x8x8xbf16, #tpu.memory_space<vmem>>, %arg5: memref<8x1xf32, #tpu.memory_space<vmem>>, %arg6: memref<1x8x16xf32, #tpu.memory_space<vmem>>, %arg7: memref<8x128xf32, #tpu.memory_space<vmem>>) attributes {dimension_semantics = [#tpu.dimension_semantics<parallel>], iteration_bounds = array<i64: 2>, scalar_prefetch = 0 : i64, scratch_operands = 1 : i64, tpu.core_type = #tpu.core_type<tc>, window_params = [{transform_indices = @transform_0, window_bounds = array<i64: 1, 8, 16>}, {pipeline_mode = #tpu.pipeline_mode<synchronous>, transform_indices = @transform_1, window_bounds = array<i64: 3, 8, 8>}, {pipeline_mode = #tpu.pipeline_mode<synchronous>, transform_indices = @transform_2, window_bounds = array<i64: 8, 1>}, {pipeline_mode = #tpu.pipeline_mode<synchronous>, transform_indices = @transform_3, window_bounds = array<i64: 3, 8, 8>}, {pipeline_mode = #tpu.pipeline_mode<synchronous>, transform_indices = @transform_4, window_bounds = array<i64: 8, 1>}, {transform_indices = @transform_5, window_bounds = array<i64: 1, 8, 16>}]} {
    %cst = arith.constant 0.000000e+00 : f32
    %0 = vector.broadcast %cst : f32 to vector<8x128xf32>
    %c0 = arith.constant 0 : index
    %c0_0 = arith.constant 0 : index
    %1 = vector.load %arg7[%c0, %c0_0] : memref<8x128xf32, #tpu.memory_space<vmem>>, vector<8x128xf32>
    tpu.vector_store %arg7[%c0, %c0_0], %0 {strides = array<i32>} : memref<8x128xf32, #tpu.memory_space<vmem>>, vector<8x128xf32>,
    %c0_1 = arith.constant 0 : index
    %c0_2 = arith.constant 0 : index
    %c0_3 = arith.constant 0 : index
    %2 = vector.load %arg1[%c0_1, %c0_2, %c0_3] : memref<1x8x16xf32, #tpu.memory_space<vmem>>, vector<1x8x16xf32>
    %3 = vector.shape_cast %2 : vector<1x8x16xf32> to vector<8x16xf32>
    %c0_4 = arith.constant 0 : index
    %c0_5 = arith.constant 0 : index
    %4 = vector.load %arg7[%c0_4, %c0_5] : memref<8x128xf32, #tpu.memory_space<vmem>>, vector<8x16xf32>
    tpu.vector_store %arg7[%c0_4, %c0_5], %3 {strides = array<i32>} : memref<8x128xf32, #tpu.memory_space<vmem>>, vector<8x16xf32>,
    %c0_6 = arith.constant 0 : index
    %c0_7 = arith.constant 0 : index
    %5 = vector.load %arg7[%c0_6, %c0_7] : memref<8x128xf32, #tpu.memory_space<vmem>>, vector<8x128xf32>
    %c1_i32 = arith.constant 1 : i32
    %6 = tpu.dynamic_rotate %5 by %c1_i32 dim 1 : vector<8x128xf32>, i32 -> vector<8x128xf32>
    %c127_i32 = arith.constant 127 : i32
    %7 = tpu.dynamic_rotate %5 by %c127_i32 dim 1 : vector<8x128xf32>, i32 -> vector<8x128xf32>
    %c0_8 = arith.constant 0 : index
    %c0_9 = arith.constant 0 : index
    %c0_10 = arith.constant 0 : index
    %8 = vector.load %arg2[%c0_8, %c0_9, %c0_10] : memref<3x8x8xbf16, #tpu.memory_space<vmem>>, vector<1x8x8xbf16>
    %9 = vector.shape_cast %8 : vector<1x8x8xbf16> to vector<8x8xbf16>
    %10 = arith.truncf %6 : vector<8x128xf32> to vector<8x128xbf16>
    %cst_11 = arith.constant dense<0.000000e+00> : vector<8x128xf32>
    %11 = tpu.matmul %9, %10, %cst_11 {dimension_numbers = #tpu.dot_dimension_numbers<[1], [0], [0], [1], [0, 0, 1, 1], [], []>} : vector<8x8xbf16>, vector<8x128xbf16>, vector<8x128xf32> -> vector<8x128xf32>
    %c1 = arith.constant 1 : index
    %c0_12 = arith.constant 0 : index
    %c0_13 = arith.constant 0 : index
    %12 = vector.load %arg2[%c1, %c0_12, %c0_13] : memref<3x8x8xbf16, #tpu.memory_space<vmem>>, vector<1x8x8xbf16>
    %13 = vector.shape_cast %12 : vector<1x8x8xbf16> to vector<8x8xbf16>
    %14 = arith.truncf %5 : vector<8x128xf32> to vector<8x128xbf16>
    %cst_14 = arith.constant dense<0.000000e+00> : vector<8x128xf32>
    %15 = tpu.matmul %13, %14, %cst_14 {dimension_numbers = #tpu.dot_dimension_numbers<[1], [0], [0], [1], [0, 0, 1, 1], [], []>} : vector<8x8xbf16>, vector<8x128xbf16>, vector<8x128xf32> -> vector<8x128xf32>
    %16 = arith.addf %11, %15 : vector<8x128xf32>
    %c2 = arith.constant 2 : index
    %c0_15 = arith.constant 0 : index
    %c0_16 = arith.constant 0 : index
    %17 = vector.load %arg2[%c2, %c0_15, %c0_16] : memref<3x8x8xbf16, #tpu.memory_space<vmem>>, vector<1x8x8xbf16>
    %18 = vector.shape_cast %17 : vector<1x8x8xbf16> to vector<8x8xbf16>
    %19 = arith.truncf %7 : vector<8x128xf32> to vector<8x128xbf16>
    %cst_17 = arith.constant dense<0.000000e+00> : vector<8x128xf32>
    %20 = tpu.matmul %18, %19, %cst_17 {dimension_numbers = #tpu.dot_dimension_numbers<[1], [0], [0], [1], [0, 0, 1, 1], [], []>} : vector<8x8xbf16>, vector<8x128xbf16>, vector<8x128xf32> -> vector<8x128xf32>
    %21 = arith.addf %16, %20 : vector<8x128xf32>
    %c0_18 = arith.constant 0 : index
    %c0_19 = arith.constant 0 : index
    %22 = vector.load %arg3[%c0_18, %c0_19] : memref<8x1xf32, #tpu.memory_space<vmem>>, vector<8x1xf32>
    %23 = vector.broadcast %22 : vector<8x1xf32> to vector<8x128xf32>
    %24 = arith.addf %21, %23 : vector<8x128xf32>
    %cst_20 = arith.constant 0.000000e+00 : f32
    %25 = vector.broadcast %cst_20 : f32 to vector<8x128xf32>
    %26 = arith.maximumf %24, %25 : vector<8x128xf32>
    %27 = vector.extract_strided_slice %26 {offsets = [0, 0], sizes = [8, 16], strides = [1, 1]} : vector<8x128xf32> to vector<8x16xf32>
    %c0_21 = arith.constant 0 : index
    %c0_22 = arith.constant 0 : index
    %28 = vector.load %arg7[%c0_21, %c0_22] : memref<8x128xf32, #tpu.memory_space<vmem>>, vector<8x16xf32>
    tpu.vector_store %arg7[%c0_21, %c0_22], %27 {strides = array<i32>} : memref<8x128xf32, #tpu.memory_space<vmem>>, vector<8x16xf32>,
    %c0_23 = arith.constant 0 : index
    %c0_24 = arith.constant 0 : index
    %29 = vector.load %arg7[%c0_23, %c0_24] : memref<8x128xf32, #tpu.memory_space<vmem>>, vector<8x128xf32>
    %c1_i32_25 = arith.constant 1 : i32
    %30 = tpu.dynamic_rotate %29 by %c1_i32_25 dim 1 : vector<8x128xf32>, i32 -> vector<8x128xf32>
    %c127_i32_26 = arith.constant 127 : i32
    %31 = tpu.dynamic_rotate %29 by %c127_i32_26 dim 1 : vector<8x128xf32>, i32 -> vector<8x128xf32>
    %c0_27 = arith.constant 0 : index
    %c0_28 = arith.constant 0 : index
    %c0_29 = arith.constant 0 : index
    %32 = vector.load %arg4[%c0_27, %c0_28, %c0_29] : memref<3x8x8xbf16, #tpu.memory_space<vmem>>, vector<1x8x8xbf16>
    %33 = vector.shape_cast %32 : vector<1x8x8xbf16> to vector<8x8xbf16>
    %34 = arith.truncf %30 : vector<8x128xf32> to vector<8x128xbf16>
    %cst_30 = arith.constant dense<0.000000e+00> : vector<8x128xf32>
    %35 = tpu.matmul %33, %34, %cst_30 {dimension_numbers = #tpu.dot_dimension_numbers<[1], [0], [0], [1], [0, 0, 1, 1], [], []>} : vector<8x8xbf16>, vector<8x128xbf16>, vector<8x128xf32> -> vector<8x128xf32>
    %c1_31 = arith.constant 1 : index
    %c0_32 = arith.constant 0 : index
    %c0_33 = arith.constant 0 : index
    %36 = vector.load %arg4[%c1_31, %c0_32, %c0_33] : memref<3x8x8xbf16, #tpu.memory_space<vmem>>, vector<1x8x8xbf16>
    %37 = vector.shape_cast %36 : vector<1x8x8xbf16> to vector<8x8xbf16>
    %38 = arith.truncf %29 : vector<8x128xf32> to vector<8x128xbf16>
    %cst_34 = arith.constant dense<0.000000e+00> : vector<8x128xf32>
    %39 = tpu.matmul %37, %38, %cst_34 {dimension_numbers = #tpu.dot_dimension_numbers<[1], [0], [0], [1], [0, 0, 1, 1], [], []>} : vector<8x8xbf16>, vector<8x128xbf16>, vector<8x128xf32> -> vector<8x128xf32>
    %40 = arith.addf %35, %39 : vector<8x128xf32>
    %c2_35 = arith.constant 2 : index
    %c0_36 = arith.constant 0 : index
    %c0_37 = arith.constant 0 : index
    %41 = vector.load %arg4[%c2_35, %c0_36, %c0_37] : memref<3x8x8xbf16, #tpu.memory_space<vmem>>, vector<1x8x8xbf16>
    %42 = vector.shape_cast %41 : vector<1x8x8xbf16> to vector<8x8xbf16>
    %43 = arith.truncf %31 : vector<8x128xf32> to vector<8x128xbf16>
    %cst_38 = arith.constant dense<0.000000e+00> : vector<8x128xf32>
    %44 = tpu.matmul %42, %43, %cst_38 {dimension_numbers = #tpu.dot_dimension_numbers<[1], [0], [0], [1], [0, 0, 1, 1], [], []>} : vector<8x8xbf16>, vector<8x128xbf16>, vector<8x128xf32> -> vector<8x128xf32>
    %45 = arith.addf %40, %44 : vector<8x128xf32>
    %c0_39 = arith.constant 0 : index
    %c0_40 = arith.constant 0 : index
    %46 = vector.load %arg5[%c0_39, %c0_40] : memref<8x1xf32, #tpu.memory_space<vmem>>, vector<8x1xf32>
    %47 = vector.broadcast %46 : vector<8x1xf32> to vector<8x128xf32>
    %48 = arith.addf %45, %47 : vector<8x128xf32>
    %49 = arith.addf %48, %5 : vector<8x128xf32>
    %cst_41 = arith.constant 0.000000e+00 : f32
    %50 = vector.broadcast %cst_41 : f32 to vector<8x128xf32>
    %51 = arith.maximumf %49, %50 : vector<8x128xf32>
    %52 = vector.extract_strided_slice %51 {offsets = [0, 0], sizes = [8, 16], strides = [1, 1]} : vector<8x128xf32> to vector<8x16xf32>
    %c0_42 = arith.constant 0 : index
    %c0_43 = arith.constant 0 : index
    %c0_44 = arith.constant 0 : index
    %53 = vector.load %arg6[%c0_42, %c0_43, %c0_44] : memref<1x8x16xf32, #tpu.memory_space<vmem>>, vector<1x8x16xf32>
    %54 = vector.shape_cast %53 : vector<1x8x16xf32> to vector<8x16xf32>
    %55 = vector.shape_cast %52 : vector<8x16xf32> to vector<1x8x16xf32>
    tpu.vector_store %arg6[%c0_42, %c0_43, %c0_44], %55 {strides = array<i32>} : memref<1x8x16xf32, #tpu.memory_space<vmem>>, vector<1x8x16xf32>,
    return
  }
  func.func @transform_0(%arg0: i32) -> (i32, i32, i32) {
    %c0_i32 = arith.constant 0 : i32
    %c0_i32_0 = arith.constant 0 : i32
    %c0_i32_1 = arith.constant 0 : i32
    return %arg0, %c0_i32, %c0_i32_0 : i32, i32, i32
  }
  func.func @transform_1(%arg0: i32) -> (i32, i32, i32) {
    %c0_i32 = arith.constant 0 : i32
    %c0_i32_0 = arith.constant 0 : i32
    %c0_i32_1 = arith.constant 0 : i32
    %c0_i32_2 = arith.constant 0 : i32
    return %c0_i32, %c0_i32_0, %c0_i32_1 : i32, i32, i32
  }
  func.func @transform_2(%arg0: i32) -> (i32, i32) {
    %c0_i32 = arith.constant 0 : i32
    %c0_i32_0 = arith.constant 0 : i32
    %c0_i32_1 = arith.constant 0 : i32
    return %c0_i32, %c0_i32_0 : i32, i32
  }
  func.func @transform_3(%arg0: i32) -> (i32, i32, i32) {
    %c0_i32 = arith.constant 0 : i32
    %c0_i32_0 = arith.constant 0 : i32
    %c0_i32_1 = arith.constant 0 : i32
    %c0_i32_2 = arith.constant 0 : i32
    return %c0_i32, %c0_i32_0, %c0_i32_1 : i32, i32, i32
  }
  func.func @transform_4(%arg0: i32) -> (i32, i32) {
    %c0_i32 = arith.constant 0 : i32
    %c0_i32_0 = arith.constant 0 : i32
    %c0_i32_1 = arith.constant 0 : i32
    return %c0_i32, %c0_i32_0 : i32, i32
  }
  func.func @transform_5(%arg0: i32) -> (i32, i32, i32) {
    %c0_i32 = arith.constant 0 : i32
    %c0_i32_0 = arith.constant 0 : i32
    %c0_i32_1 = arith.constant 0 : i32
    return %arg0, %c0_i32, %c0_i32_0 : i32, i32, i32
  }
}

</mosaic_0001>

<llo_original>
// kernel: tpu_custom_call.1
$region0: #{tpu_custom_call.1}
  #allocation0 [shape = 'u32[]', space=smem, size = 0x4, offset = 0x4, fixed_abs, tag = 'smem constant byte address 0x4 - core index']
  #allocation1 [shape = 'u32[144,128]{1,0:T(1,128)}', space=vmem, size = 0x12000, scoped, tag = 'internal scratch']
  #allocation2 [shape = 'f32[8,128]{1,0:T(8,128)}', space=vmem, size = 0x1000, scoped, tag = 'scratch operand']
  %s0 = inlined_call_operand.vmem [shape: f32[2,8,16], index: 0, kind: input, shape index: {}]
  %s1 = inlined_call_operand.hbm [shape: bf16[3,8,8], index: 1, kind: input, shape index: {}]
  %s2 = inlined_call_operand.vmem [shape: f32[8,1], index: 2, kind: input, shape index: {}]
  %s3 = inlined_call_operand.vmem [shape: bf16[3,8,8], index: 3, kind: input, shape index: {}]
  %s4 = inlined_call_operand.vmem [shape: f32[8,1], index: 4, kind: input, shape index: {}]
  %s5 = inlined_call_operand.hbm [shape: f32[2,8,16], index: 5, kind: output, shape index: {}]
  %s6 = sld [smem:[#allocation0]]
  $region57: #{tpu_custom_call.1} parent=0
    _
  %s8 = ssub.s32 1, %s6
  %s9 = scalar_select 0, %s8, %s6
  $region1: #{tpu_custom_call.1} parent=0
    #allocation3 [shape = 'u8[6144]{0}', space=vmem, size = 0x1800, scoped, tag = 'input window, operand 1, single buffered']
    #allocation4 [shape = 's32[2]{0}', space=sflag, size = 0x8, scoped, tag = 'scoped memory for tpu_custom_call.1']
    #allocation5 [shape = 's32[2]{0}', space=sflag, size = 0x8, scoped, tag = 'scoped memory for tpu_custom_call.1']
    #allocation6 [shape = 'u8[8192]{0}', space=vmem, size = 0x2000, scoped, tag = 'output window, operand 0']
    %10 = vsyncpa [#allocation4], 0
    %11 = vsyncpa [#allocation5], 0
    %s12 = scalar_lea.sflag [#allocation5], 1
    %13 = vsyncpa %s12, 0
    loop: start=0, step=1, limit=4
    $region2: #{tpu_custom_call.1} parent=1 // loop_pre_header
      _
    $region3: #{tpu_custom_call.1} parent=1 // loop_header
      %s15 = sphi 0, %s19
      %p16 = scmp.ge.s32.totalorder %s15, 4
      %s25 = sphi 0, %s27
      %s28 = sphi 0, %s25
      %s29 = sphi 0, %s28
      %s45 = sphi 0, %s29
      %s49 = sphi 0, %s49
      %s51 = sphi 0, %s49
      %s52 = sphi 0, %s51
      %s66 = sphi 0, %s52
      %s70 = sphi 0, %s70
      %s72 = sphi 0, %s70
      %s73 = sphi 0, %s72
      %s87 = sphi 0, %s73
      %s91 = sphi 0, %s91
      %s93 = sphi 0, %s91
      %s94 = sphi 0, %s93
      %s108 = sphi 0, %s94
      %s112 = sphi 0, %s112
      %s114 = sphi 0, %s112
      %s115 = sphi 0, %s114
      %s129 = sphi 0, %s115
      %s135 = sphi 0, %s137
      %s138 = sphi 0, %s135
      %s139 = sphi 0, %s138
      %s155 = sphi 0, %s139
    $region4: #{tpu_custom_call.1} parent=1 // loop_header_branch
      %18 = sbr.rel (%p16) target = $region8
    $region5: #{tpu_custom_call.1} parent=1 // loop_body
      %s20 = ssub.s32 %s15, 1
      %s21 = ssub.s32 %s15, 2
      %s22 = sadd.s32 %s15, 1
      %s23 = ssub.s32 %s15, %s22
      %p24 = scmp.eq.s32.totalorder %s23, 0
      %s26 = sadd.s32 %s25, 1
      %s27 = scalar_select %p24, %s25, %s26
      %p30 = pneg %p24
      %p31 = scmp.eq.s32.totalorder %s15, 1
      %p32 = por %p30, %p31
      %p33 = scmp.ne.s32.totalorder %s25, %s28
      %p34 = scmp.eq.s32.totalorder %s15, 0
      %p35 = por %p33, %p34
      %p36 = scmp.ne.s32.totalorder %s25, %s28
      %p37 = scmp.eq.s32.totalorder %s20, 1
      %p38 = por %p36, %p37
      %p39 = scmp.ne.s32.totalorder %s28, %s29
      %p40 = scmp.eq.s32.totalorder %s20, 0
      %p41 = por %p39, %p40
      %p42 = scmp.ne.s32.totalorder %s28, %s29
      %p43 = scmp.eq.s32.totalorder %s21, 1
      %p44 = por %p42, %p43
      %p46 = scmp.ne.s32.totalorder %s29, %s45
      %p47 = scmp.eq.s32.totalorder %s21, 0
      %p48 = por %p46, %p47
      %s50 = sadd.s32 %s49, 1
      %p53 = scmp.eq.s32.totalorder %s15, 1
      %p54 = scmp.ne.s32.totalorder %s49, %s51
      %p55 = scmp.eq.s32.totalorder %s15, 0
      %p56 = por %p54, %p55
      %p57 = scmp.ne.s32.totalorder %s49, %s51
      %p58 = scmp.eq.s32.totalorder %s20, 1
      %p59 = por %p57, %p58
      %p60 = scmp.ne.s32.totalorder %s51, %s52
      %p61 = scmp.eq.s32.totalorder %s20, 0
      %p62 = por %p60, %p61
      %p63 = scmp.ne.s32.totalorder %s51, %s52
      %p64 = scmp.eq.s32.totalorder %s21, 1
      %p65 = por %p63, %p64
      %p67 = scmp.ne.s32.totalorder %s52, %s66
      %p68 = scmp.eq.s32.totalorder %s21, 0
      %p69 = por %p67, %p68
      %s71 = sadd.s32 %s70, 1
      %p74 = scmp.eq.s32.totalorder %s15, 1
      %p75 = scmp.ne.s32.totalorder %s70, %s72
      %p76 = scmp.eq.s32.totalorder %s15, 0
      %p77 = por %p75, %p76
      %p78 = scmp.ne.s32.totalorder %s70, %s72
      %p79 = scmp.eq.s32.totalorder %s20, 1
      %p80 = por %p78, %p79
      %p81 = scmp.ne.s32.totalorder %s72, %s73
      %p82 = scmp.eq.s32.totalorder %s20, 0
      %p83 = por %p81, %p82
      %p84 = scmp.ne.s32.totalorder %s72, %s73
      %p85 = scmp.eq.s32.totalorder %s21, 1
      %p86 = por %p84, %p85
      %p88 = scmp.ne.s32.totalorder %s73, %s87
      %p89 = scmp.eq.s32.totalorder %s21, 0
      %p90 = por %p88, %p89
      %s92 = sadd.s32 %s91, 1
      %p95 = scmp.eq.s32.totalorder %s15, 1
      %p96 = scmp.ne.s32.totalorder %s91, %s93
      %p97 = scmp.eq.s32.totalorder %s15, 0
      %p98 = por %p96, %p97
      %p99 = scmp.ne.s32.totalorder %s91, %s93
      %p100 = scmp.eq.s32.totalorder %s20, 1
      %p101 = por %p99, %p100
      %p102 = scmp.ne.s32.totalorder %s93, %s94
      %p103 = scmp.eq.s32.totalorder %s20, 0
      %p104 = por %p102, %p103
      %p105 = scmp.ne.s32.totalorder %s93, %s94
      %p106 = scmp.eq.s32.totalorder %s21, 1
      %p107 = por %p105, %p106
      %p109 = scmp.ne.s32.totalorder %s94, %s108
      %p110 = scmp.eq.s32.totalorder %s21, 0
      %p111 = por %p109, %p110
      %s113 = sadd.s32 %s112, 1
      %p116 = scmp.eq.s32.totalorder %s15, 1
      %p117 = scmp.ne.s32.totalorder %s112, %s114
      %p118 = scmp.eq.s32.totalorder %s15, 0
      %p119 = por %p117, %p118
      %p120 = scmp.ne.s32.totalorder %s112, %s114
      %p121 = scmp.eq.s32.totalorder %s20, 1
      %p122 = por %p120, %p121
      %p123 = scmp.ne.s32.totalorder %s114, %s115
      %p124 = scmp.eq.s32.totalorder %s20, 0
      %p125 = por %p123, %p124
      %p126 = scmp.ne.s32.totalorder %s114, %s115
      %p127 = scmp.eq.s32.totalorder %s21, 1
      %p128 = por %p126, %p127
      %p130 = scmp.ne.s32.totalorder %s115, %s129
      %p131 = scmp.eq.s32.totalorder %s21, 0
      %p132 = por %p130, %p131
      %s133 = ssub.s32 %s15, %s22
      %p134 = scmp.eq.s32.totalorder %s133, 0
      %s136 = sadd.s32 %s135, 1
      %s137 = scalar_select %p134, %s135, %s136
      %p140 = pneg %p134
      %p141 = scmp.eq.s32.totalorder %s15, 1
      %p142 = por %p140, %p141
      %p143 = scmp.ne.s32.totalorder %s135, %s138
      %p144 = scmp.eq.s32.totalorder %s15, 0
      %p145 = por %p143, %p144
      %p146 = scmp.ne.s32.totalorder %s135, %s138
      %p147 = scmp.eq.s32.totalorder %s20, 1
      %p148 = por %p146, %p147
      %p149 = scmp.ne.s32.totalorder %s138, %s139
      %p150 = scmp.eq.s32.totalorder %s20, 0
      %p151 = por %p149, %p150
      %p152 = scmp.ne.s32.totalorder %s138, %s139
      %p153 = scmp.eq.s32.totalorder %s21, 1
      %p154 = por %p152, %p153
      %p156 = scmp.ne.s32.totalorder %s139, %s155
      %p157 = scmp.eq.s32.totalorder %s21, 0
      %p158 = por %p156, %p157
      %p159 = scmp.le.s32.totalorder 1, %s15
      %p160 = scmp.lt.s32.totalorder %s15, 3
      %p161 = pnand %p159, %p160
      %p162 = pneg %p161
      // Predicated region
      $region9: #{tpu_custom_call.1} parent=5 // pred_check
        _
      $region10: #{tpu_custom_call.1} parent=5 // pred_check_branch
        %164 = sbr.rel (%p161) target = $region12
      $region11: #{tpu_custom_call.1} parent=5 // pred_region
        %s165 = ssub.s32 %s15, 1
        // Predicated region
        $region13: #{tpu_custom_call.1} parent=11 // pred_check
          %p166 = pneg %p62
        $region14: #{tpu_custom_call.1} parent=11 // pred_check_branch
          %168 = sbr.rel (%p166) target = $region16
        $region15: #{tpu_custom_call.1} parent=11 // pred_region
          %s170 = ssub.s32 192, 192
          %171 = vsyncadd [#allocation4], %s170
          %s172 = sshll.u32 [#allocation3], 4
          %s173 = int_to_ptr.vmem [resolvable:$true] %s172
          %178 = dma.hbm_to_vmem [thread:$0]  %s1, 192, %s173, [#allocation4], 64, 64, 4
        $region16: #{tpu_custom_call.1} parent=11 // pred_fallthru
          _
        // Predicated region
        $region17: #{tpu_custom_call.1} parent=11 // pred_check
          %p179 = pneg %p83
        $region18: #{tpu_custom_call.1} parent=11 // pred_check_branch
          %181 = sbr.rel (%p179) target = $region20
        $region19: #{tpu_custom_call.1} parent=11 // pred_region
          _
        $region20: #{tpu_custom_call.1} parent=11 // pred_fallthru
          _
        // Predicated region
        $region21: #{tpu_custom_call.1} parent=11 // pred_check
          %p182 = pneg %p104
        $region22: #{tpu_custom_call.1} parent=11 // pred_check_branch
          %184 = sbr.rel (%p182) target = $region24
        $region23: #{tpu_custom_call.1} parent=11 // pred_region
          _
        $region24: #{tpu_custom_call.1} parent=11 // pred_fallthru
          _
        // Predicated region
        $region25: #{tpu_custom_call.1} parent=11 // pred_check
          %p185 = pneg %p125
        $region26: #{tpu_custom_call.1} parent=11 // pred_check_branch
          %187 = sbr.rel (%p185) target = $region28
        $region27: #{tpu_custom_call.1} parent=11 // pred_region
          _
        $region28: #{tpu_custom_call.1} parent=11 // pred_fallthru
          _
      $region12: #{tpu_custom_call.1} parent=5 // pred_fallthru
        _
      %p188 = scmp.lt.s32.totalorder %s15, 2
      // Predicated region
      $region29: #{tpu_custom_call.1} parent=5 // pred_check
        %p189 = pneg %p188
      $region30: #{tpu_custom_call.1} parent=5 // pred_check_branch
        %191 = sbr.rel (%p189) target = $region32
      $region31: #{tpu_custom_call.1} parent=5 // pred_region
        // Predicated region
        $region33: #{tpu_custom_call.1} parent=31 // pred_check
          %p192 = pneg %p35
        $region34: #{tpu_custom_call.1} parent=31 // pred_check_branch
          %194 = sbr.rel (%p192) target = $region36
        $region35: #{tpu_custom_call.1} parent=31 // pred_region
          %p195 = scmp.lt.s32.totalorder %s15, 1
          %s196 = scalar_select %p195, %s15, 1
          %s197 = smul.addr %s196, 8
          %s198 = scalar_lea.vmem %s0, %s197
        $region36: #{tpu_custom_call.1} parent=31 // pred_fallthru
          _
      $region32: #{tpu_custom_call.1} parent=5 // pred_fallthru
        _
      %p199 = scmp.le.s32.totalorder 1, %s15
      %p200 = scmp.lt.s32.totalorder %s15, 3
      %p201 = pnand %p199, %p200
      %p202 = pneg %p201
      // Predicated region
      $region37: #{tpu_custom_call.1} parent=5 // pred_check
        _
      $region38: #{tpu_custom_call.1} parent=5 // pred_check_branch
        %204 = sbr.rel (%p201) target = $region40
      $region39: #{tpu_custom_call.1} parent=5 // pred_region
        %s205 = ssub.s32 %s15, 1
        // Predicated region
        $region41: #{tpu_custom_call.1} parent=39 // pred_check
          %p206 = pneg %p62
        $region42: #{tpu_custom_call.1} parent=39 // pred_check_branch
          %208 = sbr.rel (%p206) target = $region44
        $region43: #{tpu_custom_call.1} parent=39 // pred_region
          %209 = dma.done [#allocation4], 192
        $region44: #{tpu_custom_call.1} parent=39 // pred_fallthru
          _
        %p210 = scmp.lt.s32.totalorder %s20, 1
        %s211 = scalar_select %p210, %s20, 1
        %s212 = smul.addr %s211, 8
        %s213 = scalar_lea.vmem %s0, %s212
        %p214 = pneg %p41
        %p215 = pneg %p38
        %p216 = pneg %p62
        %p217 = pneg %p59
        %p218 = pneg %p83
        %p219 = pneg %p80
        %p220 = pneg %p104
        %p221 = pneg %p101
        %p222 = pneg %p125
        %p223 = pneg %p122
        %p224 = pneg %p151
        %p225 = pneg %p148
        %s226 = sand.u32 %s138, 1
        %s227 = scalar_lea.sflag [#allocation5], %s226
        %s228 = sand.u32 %s138, 1
        %s229 = smul.addr %s228, 8
        %s230 = scalar_lea.vmem [#allocation6], %s229
        %p231 = scmp.lt.s32.totalorder %s20, 1
        %s232 = scalar_select %p231, %s20, 1
        %s233 = smul.addr %s232, 8
        %s234 = scalar_lea.vmem %s0, %s233
        %236 = vst [vmem:[#allocation2] sm:$0xff] 0.0
        %v237 = vld [vmem:[%s234] sm:$0xff]
        %vm238 = vcmask 130048
        %239 = vst.msk [vmem:[#allocation2] sm:$0xff] %vm238, %v237
        %v240 = vld [vmem:[#allocation2] sm:$0xff]
        %241 = vrot.lane.b32.xlu0 %v240, 1
        %v242 = vpop.permute.xlu0 %241
        %243 = vrot.lane.b32.xlu0 %v240, 127
        %v244 = vpop.permute.xlu0 %243
        %v245 = vld [vmem:[#allocation3] sm:$0xf]
        %v246 = vpack.c.bf16 %v242, %v242
        %s247 = scalar_lea.vmem [#allocation3], 4
        %v248 = vld [vmem:[%s247] sm:$0xf]
        %v249 = vpack.c.bf16 %v240, %v240
        %vm250 = vcmask 64512
        %v252 = vsel %vm250, %v248, 0
        %vm254 = vcmask 1043456
        %v256 = vsel %vm254, %v249, 0
        %258 = vmatprep.subr.bf16.mxu0 0
        %259 = vmatpush1.bf16.msra.mxu0 %v256
        %260 = vmatprep.subr.bf16.mxu0 0
        %261 = vmatpush1.bf16.msra.mxu0 0
        %262 = vmatprep.subr.bf16.mxu0 0
        %263 = vmatpush1.bf16.msra.mxu0 0
        %264 = vmatprep.subr.bf16.mxu0 0
        %265 = vmatpush1.bf16.msra.mxu0 0
        %266 = vmatprep.subr.bf16.mxu0 0
        %267 = vmatpush1.bf16.msra.mxu0 0
        %268 = vmatprep.subr.bf16.mxu0 0
        %269 = vmatpush1.bf16.msra.mxu0 0
        %270 = vmatprep.subr.bf16.mxu0 0
        %271 = vmatpush1.bf16.msra.mxu0 0
        %272 = vmatprep.subr.bf16.mxu0 0
        %273 = vmatpush1.bf16.msra.mxu0 0
        %274 = vmatprep.subr.bf16.mxu0 0
        %275 = vmatpush1.bf16.msra.mxu0 0
        %276 = vmatprep.subr.bf16.mxu0 0
        %277 = vmatpush1.bf16.msra.mxu0 0
        %278 = vmatprep.subr.bf16.mxu0 0
        %279 = vmatpush1.bf16.msra.mxu0 0
        %280 = vmatprep.subr.bf16.mxu0 0
        %281 = vmatpush1.bf16.msra.mxu0 0
        %282 = vmatprep.subr.bf16.mxu0 0
        %283 = vmatpush1.bf16.msra.mxu0 0
        %284 = vmatprep.subr.bf16.mxu0 0
        %285 = vmatpush1.bf16.msra.mxu0 0
        %286 = vmatprep.subr.bf16.mxu0 0
        %287 = vmatpush1.bf16.msra.mxu0 0
        %288 = vmatprep.subr.bf16.mxu0 0
        %289 = vmatpush1.bf16.msra.mxu0 0
        %290 = vmatprep.mubr.bf16.mxu0 0
        %291 = vmatmul.mubr.bf16.gmra.mrb[0].mxu0 %v252
        %v292 = vpop.f32.mrb[0].mxu0
        %v293 = vadd.f32 0.0, %v292
        %v294 = vpop.f32.mrb[0].mxu0
        %v295 = vpop.f32.mrb[0].mxu0
        %v296 = vpop.f32.mrb[0].mxu0
        %297 = vdwg.mxu0
        %v299 = vsel %vm250, %v245, 0
        %v302 = vsel %vm254, %v246, 0
        %304 = vmatprep.subr.bf16.mxu0 0
        %305 = vmatpush1.bf16.msra.mxu0 %v302
        %306 = vmatprep.subr.bf16.mxu0 0
        %307 = vmatpush1.bf16.msra.mxu0 0
        %308 = vmatprep.subr.bf16.mxu0 0
        %309 = vmatpush1.bf16.msra.mxu0 0
        %310 = vmatprep.subr.bf16.mxu0 0
        %311 = vmatpush1.bf16.msra.mxu0 0
        %312 = vmatprep.subr.bf16.mxu0 0
        %313 = vmatpush1.bf16.msra.mxu0 0
        %314 = vmatprep.subr.bf16.mxu0 0
        %315 = vmatpush1.bf16.msra.mxu0 0
        %316 = vmatprep.subr.bf16.mxu0 0
        %317 = vmatpush1.bf16.msra.mxu0 0
        %318 = vmatprep.subr.bf16.mxu0 0
        %319 = vmatpush1.bf16.msra.mxu0 0
        %320 = vmatprep.subr.bf16.mxu0 0
        %321 = vmatpush1.bf16.msra.mxu0 0
        %322 = vmatprep.subr.bf16.mxu0 0
        %323 = vmatpush1.bf16.msra.mxu0 0
        %324 = vmatprep.subr.bf16.mxu0 0
        %325 = vmatpush1.bf16.msra.mxu0 0
        %326 = vmatprep.subr.bf16.mxu0 0
        %327 = vmatpush1.bf16.msra.mxu0 0
        %328 = vmatprep.subr.bf16.mxu0 0
        %329 = vmatpush1.bf16.msra.mxu0 0
        %330 = vmatprep.subr.bf16.mxu0 0
        %331 = vmatpush1.bf16.msra.mxu0 0
        %332 = vmatprep.subr.bf16.mxu0 0
        %333 = vmatpush1.bf16.msra.mxu0 0
        %334 = vmatprep.subr.bf16.mxu0 0
        %335 = vmatpush1.bf16.msra.mxu0 0
        %336 = vmatprep.mubr.bf16.mxu0 0
        %337 = vmatmul.mubr.bf16.gmra.mrb[0].mxu0 %v299
        %v338 = vpop.f32.mrb[0].mxu0
        %v339 = vadd.f32 %v293, %v338
        %v340 = vpop.f32.mrb[0].mxu0
        %v341 = vpop.f32.mrb[0].mxu0
        %v342 = vpop.f32.mrb[0].mxu0
        %343 = vdwg.mxu0
        %s344 = scalar_lea.vmem [#allocation3], 8
        %v345 = vld [vmem:[%s344] sm:$0xf]
        %v346 = vpack.c.bf16 %v244, %v244
        %v348 = vsel %vm250, %v345, 0
        %v351 = vsel %vm254, %v346, 0
        %353 = vmatprep.subr.bf16.mxu0 0
        %354 = vmatpush1.bf16.msra.mxu0 %v351
        %355 = vmatprep.subr.bf16.mxu0 0
        %356 = vmatpush1.bf16.msra.mxu0 0
        %357 = vmatprep.subr.bf16.mxu0 0
        %358 = vmatpush1.bf16.msra.mxu0 0
        %359 = vmatprep.subr.bf16.mxu0 0
        %360 = vmatpush1.bf16.msra.mxu0 0
        %361 = vmatprep.subr.bf16.mxu0 0
        %362 = vmatpush1.bf16.msra.mxu0 0
        %363 = vmatprep.subr.bf16.mxu0 0
        %364 = vmatpush1.bf16.msra.mxu0 0
        %365 = vmatprep.subr.bf16.mxu0 0
        %366 = vmatpush1.bf16.msra.mxu0 0
        %367 = vmatprep.subr.bf16.mxu0 0
        %368 = vmatpush1.bf16.msra.mxu0 0
        %369 = vmatprep.subr.bf16.mxu0 0
        %370 = vmatpush1.bf16.msra.mxu0 0
        %371 = vmatprep.subr.bf16.mxu0 0
        %372 = vmatpush1.bf16.msra.mxu0 0
        %373 = vmatprep.subr.bf16.mxu0 0
        %374 = vmatpush1.bf16.msra.mxu0 0
        %375 = vmatprep.subr.bf16.mxu0 0
        %376 = vmatpush1.bf16.msra.mxu0 0
        %377 = vmatprep.subr.bf16.mxu0 0
        %378 = vmatpush1.bf16.msra.mxu0 0
        %379 = vmatprep.subr.bf16.mxu0 0
        %380 = vmatpush1.bf16.msra.mxu0 0
        %381 = vmatprep.subr.bf16.mxu0 0
        %382 = vmatpush1.bf16.msra.mxu0 0
        %383 = vmatprep.subr.bf16.mxu0 0
        %384 = vmatpush1.bf16.msra.mxu0 0
        %385 = vmatprep.mubr.bf16.mxu0 0
        %386 = vmatmul.mubr.bf16.gmra.mrb[0].mxu0 %v348
        %v387 = vpop.f32.mrb[0].mxu0
        %v388 = vadd.f32 0.0, %v387
        %v389 = vpop.f32.mrb[0].mxu0
        %v390 = vpop.f32.mrb[0].mxu0
        %v391 = vpop.f32.mrb[0].mxu0
        %392 = vdwg.mxu0
        %v393 = vadd.f32 %v339, %v388
        %v394 = vld [vmem:[%s2] sm:$0xff]
        %396 = vset.pattern.permute.xlu0 0
        %397 = vperm.xlu0 %396, %v394
        %v398 = vpop.permute.xlu0 %397
        %v400 = vadd.f32 %v393, %v398
        %v401 = vmax.f32 %v400, 0.0
        %402 = vst.msk [vmem:[#allocation2] sm:$0xff] %vm238, %v401
        %v403 = vld [vmem:[#allocation2] sm:$0xff]
        %404 = vrot.lane.b32.xlu0 %v403, 1
        %v405 = vpop.permute.xlu0 %404
        %406 = vrot.lane.b32.xlu0 %v403, 127
        %v407 = vpop.permute.xlu0 %406
        %v408 = vld [vmem:[%s3] sm:$0xf]
        %v409 = vpack.c.bf16 %v405, %v405
        %s410 = scalar_lea.vmem %s3, 4
        %v411 = vld [vmem:[%s410] sm:$0xf]
        %v412 = vpack.c.bf16 %v403, %v403
        %v414 = vsel %vm250, %v411, 0
        %v417 = vsel %vm254, %v412, 0
        %419 = vmatprep.subr.bf16.mxu0 0
        %420 = vmatpush1.bf16.msra.mxu0 %v417
        %421 = vmatprep.subr.bf16.mxu0 0
        %422 = vmatpush1.bf16.msra.mxu0 0
        %423 = vmatprep.subr.bf16.mxu0 0
        %424 = vmatpush1.bf16.msra.mxu0 0
        %425 = vmatprep.subr.bf16.mxu0 0
        %426 = vmatpush1.bf16.msra.mxu0 0
        %427 = vmatprep.subr.bf16.mxu0 0
        %428 = vmatpush1.bf16.msra.mxu0 0
        %429 = vmatprep.subr.bf16.mxu0 0
        %430 = vmatpush1.bf16.msra.mxu0 0
        %431 = vmatprep.subr.bf16.mxu0 0
        %432 = vmatpush1.bf16.msra.mxu0 0
        %433 = vmatprep.subr.bf16.mxu0 0
        %434 = vmatpush1.bf16.msra.mxu0 0
        %435 = vmatprep.subr.bf16.mxu0 0
        %436 = vmatpush1.bf16.msra.mxu0 0
        %437 = vmatprep.subr.bf16.mxu0 0
        %438 = vmatpush1.bf16.msra.mxu0 0
        %439 = vmatprep.subr.bf16.mxu0 0
        %440 = vmatpush1.bf16.msra.mxu0 0
        %441 = vmatprep.subr.bf16.mxu0 0
        %442 = vmatpush1.bf16.msra.mxu0 0
        %443 = vmatprep.subr.bf16.mxu0 0
        %444 = vmatpush1.bf16.msra.mxu0 0
        %445 = vmatprep.subr.bf16.mxu0 0
        %446 = vmatpush1.bf16.msra.mxu0 0
        %447 = vmatprep.subr.bf16.mxu0 0
        %448 = vmatpush1.bf16.msra.mxu0 0
        %449 = vmatprep.subr.bf16.mxu0 0
        %450 = vmatpush1.bf16.msra.mxu0 0
        %451 = vmatprep.mubr.bf16.mxu0 0
        %452 = vmatmul.mubr.bf16.gmra.mrb[0].mxu0 %v414
        %v453 = vpop.f32.mrb[0].mxu0
        %v454 = vadd.f32 0.0, %v453
        %v455 = vpop.f32.mrb[0].mxu0
        %v456 = vpop.f32.mrb[0].mxu0
        %v457 = vpop.f32.mrb[0].mxu0
        %458 = vdwg.mxu0
        %v460 = vsel %vm250, %v408, 0
        %v463 = vsel %vm254, %v409, 0
        %465 = vmatprep.subr.bf16.mxu0 0
        %466 = vmatpush1.bf16.msra.mxu0 %v463
        %467 = vmatprep.subr.bf16.mxu0 0
        %468 = vmatpush1.bf16.msra.mxu0 0
        %469 = vmatprep.subr.bf16.mxu0 0
        %470 = vmatpush1.bf16.msra.mxu0 0
        %471 = vmatprep.subr.bf16.mxu0 0
        %472 = vmatpush1.bf16.msra.mxu0 0
        %473 = vmatprep.subr.bf16.mxu0 0
        %474 = vmatpush1.bf16.msra.mxu0 0
        %475 = vmatprep.subr.bf16.mxu0 0
        %476 = vmatpush1.bf16.msra.mxu0 0
        %477 = vmatprep.subr.bf16.mxu0 0
        %478 = vmatpush1.bf16.msra.mxu0 0
        %479 = vmatprep.subr.bf16.mxu0 0
        %480 = vmatpush1.bf16.msra.mxu0 0
        %481 = vmatprep.subr.bf16.mxu0 0
        %482 = vmatpush1.bf16.msra.mxu0 0
        %483 = vmatprep.subr.bf16.mxu0 0
        %484 = vmatpush1.bf16.msra.mxu0 0
        %485 = vmatprep.subr.bf16.mxu0 0
        %486 = vmatpush1.bf16.msra.mxu0 0
        %487 = vmatprep.subr.bf16.mxu0 0
        %488 = vmatpush1.bf16.msra.mxu0 0
        %489 = vmatprep.subr.bf16.mxu0 0
        %490 = vmatpush1.bf16.msra.mxu0 0
        %491 = vmatprep.subr.bf16.mxu0 0
        %492 = vmatpush1.bf16.msra.mxu0 0
        %493 = vmatprep.subr.bf16.mxu0 0
        %494 = vmatpush1.bf16.msra.mxu0 0
        %495 = vmatprep.subr.bf16.mxu0 0
        %496 = vmatpush1.bf16.msra.mxu0 0
        %497 = vmatprep.mubr.bf16.mxu0 0
        %498 = vmatmul.mubr.bf16.gmra.mrb[0].mxu0 %v460
        %v499 = vpop.f32.mrb[0].mxu0
        %v500 = vadd.f32 %v454, %v499
        %v501 = vpop.f32.mrb[0].mxu0
        %v502 = vpop.f32.mrb[0].mxu0
        %v503 = vpop.f32.mrb[0].mxu0
        %504 = vdwg.mxu0
        %s505 = scalar_lea.vmem %s3, 8
        %v506 = vld [vmem:[%s505] sm:$0xf]
        %v507 = vpack.c.bf16 %v407, %v407
        %v509 = vsel %vm250, %v506, 0
        %v512 = vsel %vm254, %v507, 0
        %514 = vmatprep.subr.bf16.mxu0 0
        %515 = vmatpush1.bf16.msra.mxu0 %v512
        %516 = vmatprep.subr.bf16.mxu0 0
        %517 = vmatpush1.bf16.msra.mxu0 0
        %518 = vmatprep.subr.bf16.mxu0 0
        %519 = vmatpush1.bf16.msra.mxu0 0
        %520 = vmatprep.subr.bf16.mxu0 0
        %521 = vmatpush1.bf16.msra.mxu0 0
        %522 = vmatprep.subr.bf16.mxu0 0
        %523 = vmatpush1.bf16.msra.mxu0 0
        %524 = vmatprep.subr.bf16.mxu0 0
        %525 = vmatpush1.bf16.msra.mxu0 0
        %526 = vmatprep.subr.bf16.mxu0 0
        %527 = vmatpush1.bf16.msra.mxu0 0
        %528 = vmatprep.subr.bf16.mxu0 0
        %529 = vmatpush1.bf16.msra.mxu0 0
        %530 = vmatprep.subr.bf16.mxu0 0
        %531 = vmatpush1.bf16.msra.mxu0 0
        %532 = vmatprep.subr.bf16.mxu0 0
        %533 = vmatpush1.bf16.msra.mxu0 0
        %534 = vmatprep.subr.bf16.mxu0 0
        %535 = vmatpush1.bf16.msra.mxu0 0
        %536 = vmatprep.subr.bf16.mxu0 0
        %537 = vmatpush1.bf16.msra.mxu0 0
        %538 = vmatprep.subr.bf16.mxu0 0
        %539 = vmatpush1.bf16.msra.mxu0 0
        %540 = vmatprep.subr.bf16.mxu0 0
        %541 = vmatpush1.bf16.msra.mxu0 0
        %542 = vmatprep.subr.bf16.mxu0 0
        %543 = vmatpush1.bf16.msra.mxu0 0
        %544 = vmatprep.subr.bf16.mxu0 0
        %545 = vmatpush1.bf16.msra.mxu0 0
        %546 = vmatprep.mubr.bf16.mxu0 0
        %547 = vmatmul.mubr.bf16.gmra.mrb[0].mxu0 %v509
        %v548 = vpop.f32.mrb[0].mxu0
        %v549 = vadd.f32 0.0, %v548
        %v550 = vpop.f32.mrb[0].mxu0
        %v551 = vpop.f32.mrb[0].mxu0
        %v552 = vpop.f32.mrb[0].mxu0
        %553 = vdwg.mxu0
        %v554 = vadd.f32 %v500, %v549
        %v555 = vld [vmem:[%s4] sm:$0xff]
        %557 = vset.pattern.permute.xlu0 0
        %558 = vperm.xlu0 %557, %v555
        %v559 = vpop.permute.xlu0 %558
        %v561 = vadd.f32 %v554, %v559
        %v562 = vadd.f32 %v561, %v240
        %v563 = vmax.f32 %v562, 0.0
        %564 = vst.msk [vmem:[%s230] sm:$0xff] %vm238, %v563
        %s565 = sand.u32 %s138, 1
        %s566 = scalar_lea.sflag [#allocation5], %s565
        %s567 = sand.u32 %s138, 1
        %s568 = smul.addr %s567, 8
        %s569 = scalar_lea.vmem [#allocation6], %s568
        // Predicated region
        $region45: #{tpu_custom_call.1} parent=39 // pred_check
          %p570 = pneg %p148
        $region46: #{tpu_custom_call.1} parent=39 // pred_check_branch
          %572 = sbr.rel (%p570) target = $region48
        $region47: #{tpu_custom_call.1} parent=39 // pred_region
          %s574 = ssub.s32 128, 128
          %575 = vsyncadd %s566, %s574
          %s576 = smul.addr %s20, 128
          %s577 = scalar_lea.hbm %s5, %s576
          %s579 = sshll.u32 %s569, 4
          %s580 = int_to_ptr.vmem [resolvable:$true] %s579
          %582 = dma.vmem_to_hbm [thread:$0]  %s580, 128, %s577, %s566
        $region48: #{tpu_custom_call.1} parent=39 // pred_fallthru
          _
      $region40: #{tpu_custom_call.1} parent=5 // pred_fallthru
        _
      %p583 = scmp.le.s32.totalorder 2, %s15
      // Predicated region
      $region49: #{tpu_custom_call.1} parent=5 // pred_check
        %p584 = pneg %p583
      $region50: #{tpu_custom_call.1} parent=5 // pred_check_branch
        %586 = sbr.rel (%p584) target = $region52
      $region51: #{tpu_custom_call.1} parent=5 // pred_region
        %s587 = ssub.s32 %s15, 2
        // Predicated region
        $region53: #{tpu_custom_call.1} parent=51 // pred_check
          %p588 = pneg %p154
        $region54: #{tpu_custom_call.1} parent=51 // pred_check_branch
          %590 = sbr.rel (%p588) target = $region56
        $region55: #{tpu_custom_call.1} parent=51 // pred_region
          %s591 = sand.u32 %s139, 1
          %s592 = scalar_lea.sflag [#allocation5], %s591
          %s593 = sand.u32 %s139, 1
          %s594 = smul.addr %s593, 8
          %s595 = scalar_lea.vmem [#allocation6], %s594
          %596 = dma.done %s592, 128
        $region56: #{tpu_custom_call.1} parent=51 // pred_fallthru
          _
      $region52: #{tpu_custom_call.1} parent=5 // pred_fallthru
        _
    $region6: #{tpu_custom_call.1} parent=1 // loop_footer
      %s19 = sadd.s32 1, %s15
    $region7: #{tpu_custom_call.1} parent=1 // loop_footer_branch
      %14 = sbr.rel target = $region3
    $region8: #{tpu_custom_call.1} parent=1 // loop_exit
      _
    %597 = vsyncpa [#allocation4], 1
    %s598 = scalar_lea.sflag [#allocation4], 1
    %599 = vsyncpa %s598, 1
    %600 = vsyncpa [#allocation5], 1
    %s601 = scalar_lea.sflag [#allocation5], 1
    %602 = vsyncpa %s601, 1

</llo_original>
